<compile_context>
chip_gen: v5e
topology: v5e:2x2
jax: 0.10.0
libtpu: 0.0.40
codegen_flags: <defaults>
</compile_context>

<pallas_src>
import functools

import jax
import jax.numpy as jnp
from jax.experimental import pallas as pl
from jax.experimental.pallas import tpu as pltpu

BN_EPS = 1e-5

_CPARAMS = pltpu.CompilerParams(
    dimension_semantics=("parallel",),
    vmem_limit_bytes=64 * 1024 * 1024,
)


def _const_map(ndim):
    return lambda *_: (0,) * ndim


# ----------------------------------------------------------------------------
# Pallas kernels
# ----------------------------------------------------------------------------
def _pre_conv_kernel(x_ref, w_ref, b_ref, s_ref, h_ref, o_ref, *, K, pad, T_out):
    """Preblock conv: K-tap conv (stride 1, dil 1) + ReLU + BN affine.

    x_ref: (1, T, Cin); w_ref: (K, Cin, Cout); b/s/h: (1, Cout); o: (1, T_out, Cout)
    Zero padding is done in-kernel (no HBM copy from jnp.pad).
    """
    cin = x_ref.shape[-1]
    cout = o_ref.shape[-1]
    x = x_ref[0]                                              # (T, Cin)
    if pad > 0:
        z = jnp.zeros((pad, cin), jnp.float32)
        x = jnp.concatenate([z, x, z], axis=0)                # (T + 2*pad, Cin)
    acc = jnp.zeros((T_out, cout), jnp.float32)
    for j in range(K):                                        # K small & static
        acc = acc + jnp.dot(x[j:j + T_out, :], w_ref[j],
                            preferred_element_type=jnp.float32)
    acc = jnp.maximum(acc + b_ref[...], 0.0)
    o_ref[0] = (acc * s_ref[...] + h_ref[...]).astype(o_ref.dtype)


def _se_res2_kernel(x_ref, pre_w, pre_b, pre_s, pre_h,
                    res_w, res_b, res_s, res_h,
                    post_w, post_b, post_s, post_h,
                    ex_w1, ex_b1, ex_w2, ex_b2,
                    o_ref, *, scale, K, dil, T):
    """Fused SERes2Block: everything VMEM-resident for one batch element.

    x_ref: (1, T, C)
    pre_w/post_w: (C, C); pre_b/s/h, post_b/s/h, ex_b2: (1, C)
    res_w: (scale-1, K, W, W); res_b/s/h: (scale-1, 1, W)
    ex_w1: (C, btl); ex_b1: (1, btl); ex_w2: (btl, C)
    """
    C = x_ref.shape[-1]
    W = C // scale
    pad = (K - 1) * dil // 2
    x_in = x_ref[0]                                           # (T, C)

    # preblock: Conv1x1 -> ReLU -> BN (inference-mode affine)
    h = jnp.dot(x_in, pre_w[...], preferred_element_type=jnp.float32) + pre_b[...]
    h = jnp.maximum(h, 0.0) * pre_s[...] + pre_h[...]

    # Res2Block: channel chunks with cascaded dilated convs
    outs = [h[:, 0:W]]
    base = jnp.zeros((T, W), jnp.float32)
    for i in range(1, scale):
        y = h[:, i * W:(i + 1) * W] + base
        if pad > 0:
            zp = jnp.zeros((pad, W), jnp.float32)
            y = jnp.concatenate([zp, y, zp], axis=0)          # (T + 2*pad, W)
        acc = jnp.zeros((T, W), jnp.float32)
        for j in range(K):
            acc = acc + jnp.dot(y[j * dil:j * dil + T, :], res_w[i - 1, j],
                                preferred_element_type=jnp.float32)
        base = (jnp.maximum(acc + res_b[i - 1], 0.0)
                * res_s[i - 1] + res_h[i - 1])
        outs.append(base)
    r = jnp.concatenate(outs, axis=-1)                        # (T, C)

    # postblock: Conv1x1 -> ReLU -> BN
    z = jnp.dot(r, post_w[...], preferred_element_type=jnp.float32) + post_b[...]
    z = jnp.maximum(z, 0.0) * post_s[...] + post_h[...]

    # squeeze-excitation (mean over T -> MLP -> sigmoid scale) + residual
    m = jnp.mean(z, axis=0, keepdims=True)                    # (1, C)
    e = jnp.maximum(
        jnp.dot(m, ex_w1[...], preferred_element_type=jnp.float32) + ex_b1[...],
        0.0)
    sc = jax.nn.sigmoid(
        jnp.dot(e, ex_w2[...], preferred_element_type=jnp.float32) + ex_b2[...])
    o_ref[0] = (z * sc + x_in).astype(o_ref.dtype)


def _tail_kernel(*refs, n_blocks, T):
    """MFA 1x1 conv (split-weight accumulation) + ASP + head, fully fused.

    refs: n_blocks block-output refs (1, T, C), then
          wc (n_blocks, C, H), bc (1, H),
          aw1 (H, btl), ab1 (1, btl), aw2 (btl, H), ab2 (1, H),
          s1/h1 (1, 2H), wp (2H, OC), bp (1, OC), s2/h2 (1, OC),
          wf (OC, NC), bf (1, NC), s3/h3 (1, NC), o_ref (1, NC)
    """
    xs = refs[:n_blocks]
    (wc, bc, aw1, ab1, aw2, ab2,
     s1, h1, wp, bp, s2, h2, wf, bf, s3, h3, o_ref) = refs[n_blocks:]

    H = bc.shape[-1]
    # MFA: conv1x1 over the (virtual) channel concat == sum of per-block matmuls
    mfa = jnp.zeros((T, H), jnp.float32)
    for i in range(n_blocks):
        mfa = mfa + jnp.dot(xs[i][0], wc[i],
                            preferred_element_type=jnp.float32)
    mfa = jnp.maximum(mfa + bc[...], 0.0)                     # (T, H)

    # Attentive statistics pooling (softmax over time, per channel)
    a = jnp.tanh(
        jnp.dot(mfa, aw1[...], preferred_element_type=jnp.float32) + ab1[...])
    logit = jnp.dot(a, aw2[...], preferred_element_type=jnp.float32) + ab2[...]
    mx = jnp.max(logit, axis=0, keepdims=True)
    ew = jnp.exp(logit - mx)
    w = ew / jnp.sum(ew, axis=0, keepdims=True)               # (T, H)
    mean = jnp.sum(w * mfa, axis=0, keepdims=True)            # (1, H)
    var = jnp.sum(w * mfa * mfa, axis=0, keepdims=True) - mean * mean
    std = jnp.sqrt(jnp.maximum(var, 0.0) + 1e-7)              # clamp: robustness
    pooled = jnp.concatenate([mean, std], axis=-1)            # (1, 2H)

    # head: BN(2H) -> Linear -> BN -> L2 normalize -> fc -> BN
    v = pooled * s1[...] + h1[...]
    v = jnp.dot(v, wp[...], preferred_element_type=jnp.float32) + bp[...]
    v = v * s2[...] + h2[...]
    nrm = jnp.sqrt(jnp.sum(v * v, axis=-1, keepdims=True))
    v = v / jnp.maximum(nrm, 1e-12)                           # F.normalize(p=2)
    y = jnp.dot(v, wf[...], preferred_element_type=jnp.float32) + bf[...]
    y = y * s3[...] + h3[...]
    o_ref[...] = y.astype(o_ref.dtype)


# ----------------------------------------------------------------------------
# Wrappers
# ----------------------------------------------------------------------------
def pre_conv(x, w, b, s, h, *, pad):
    B, T, Cin = x.shape
    K, _, Cout = w.shape
    T_out = T + 2 * pad - (K - 1)
    kern = functools.partial(_pre_conv_kernel, K=K, pad=pad, T_out=T_out)
    return pl.pallas_call(
        kern,
        out_shape=jax.ShapeDtypeStruct((B, T_out, Cout), jnp.float32),
        grid=(B,),
        in_specs=[
            pl.BlockSpec((1, T, Cin), lambda i: (i, 0, 0)),
            pl.BlockSpec((K, Cin, Cout), _const_map(3)),
            pl.BlockSpec((1, Cout), _const_map(2)),
            pl.BlockSpec((1, Cout), _const_map(2)),
            pl.BlockSpec((1, Cout), _const_map(2)),
        ],
        out_specs=pl.BlockSpec((1, T_out, Cout), lambda i: (i, 0, 0)),
        compiler_params=_CPARAMS,
    )(x, w, b, s, h)


def se_res2_block(p, x, *, scale, kernels, dil):
    B, T, C = x.shape
    weights = (p['pre_w'], p['pre_b'], p['pre_s'], p['pre_h'],
               p['res_w'], p['res_b'], p['res_s'], p['res_h'],
               p['post_w'], p['post_b'], p['post_s'], p['post_h'],
               p['ex_w1'], p['ex_b1'], p['ex_w2'], p['ex_b2'])
    kern = functools.partial(_se_res2_kernel, scale=scale, K=kernels,
                             dil=dil, T=T)
    in_specs = [pl.BlockSpec((1, T, C), lambda i: (i, 0, 0))]
    in_specs += [pl.BlockSpec(wt.shape, _const_map(wt.ndim)) for wt in weights]
    return pl.pallas_call(
        kern,
        out_shape=jax.ShapeDtypeStruct((B, T, C), jnp.float32),
        grid=(B,),
        in_specs=in_specs,
        out_specs=pl.BlockSpec((1, T, C), lambda i: (i, 0, 0)),
        compiler_params=_CPARAMS,
    )(x, *weights)


def tail(params, cfg, xs):
    B, T, C = xs[0].shape
    n = len(xs)
    NC = cfg['num_classes']
    c = params['conv1x1']
    a = params['asp']
    hd = params['head']
    weights = (c['w'], c['b'],
               a['w1'], a['b1'], a['w2'], a['b2'],
               hd['s1'], hd['h1'], hd['wp'], hd['bp'], hd['s2'], hd['h2'],
               hd['wf'], hd['bf'], hd['s3'], hd['h3'])
    kern = functools.partial(_tail_kernel, n_blocks=n, T=T)
    in_specs = [pl.BlockSpec((1, T, C), lambda i: (i, 0, 0)) for _ in range(n)]
    in_specs += [pl.BlockSpec(wt.shape, _const_map(wt.ndim)) for wt in weights]
    return pl.pallas_call(
        kern,
        out_shape=jax.ShapeDtypeStruct((B, NC), jnp.float32),
        grid=(B,),
        in_specs=in_specs,
        out_specs=pl.BlockSpec((1, NC), lambda i: (i, 0)),
        compiler_params=_CPARAMS,
    )(*xs, *weights)


# ----------------------------------------------------------------------------
# Model (parameter init + forward orchestration)
# ----------------------------------------------------------------------------
class KeyGen:
    def __init__(self, seed=0):
        self.key = jax.random.PRNGKey(seed)

    def __call__(self):
        self.key, k = jax.random.split(self.key)
        return k


def _bn_affine(n):
    gamma = jnp.ones((n,), jnp.float32)
    beta = jnp.zeros((n,), jnp.float32)
    rm = jnp.zeros((n,), jnp.float32)
    rv = jnp.ones((n,), jnp.float32)
    s = gamma / jnp.sqrt(rv + BN_EPS)
    return s.reshape(1, n), (beta - rm * s).reshape(1, n)


def init_params(cfg, seed=0):
    kg = KeyGen(seed)
    C = cfg['channels']
    S = cfg['scale']
    K = cfg['kernels']
    W = C // S
    btl = cfg['bottleneck']
    H = cfg['hiddens']
    OC = cfg['out_channels']
    NC = cfg['num_classes']
    n_dil = len(cfg['dilations'])

    def w_init(shape, std=0.1):
        return jax.random.normal(kg(), shape, jnp.float32) * std

    def b_init(n):
        return (jax.random.normal(kg(), (n,), jnp.float32) * 0.01).reshape(1, n)

    params = {}
    s, h = _bn_affine(C)
    params['pre'] = dict(
        w=w_init((cfg['prekernels'], cfg['in_channels'], C)),
        b=b_init(C), s=s, h=h)

    blocks = []
    for _ in range(n_dil):
        bp = {}
        bp['pre_w'] = w_init((C, C))
        bp['pre_b'] = b_init(C)
        bp['pre_s'], bp['pre_h'] = _bn_affine(C)

        bp['res_w'] = w_init((S - 1, K, W, W))
        bp['res_b'] = jnp.stack([b_init(W) for _ in range(S - 1)])   # (S-1,1,W)
        rs, rh = zip(*[_bn_affine(W) for _ in range(S - 1)])
        bp['res_s'] = jnp.stack(rs)                                  # (S-1,1,W)
        bp['res_h'] = jnp.stack(rh)

        bp['post_w'] = w_init((C, C))
        bp['post_b'] = b_init(C)
        bp['post_s'], bp['post_h'] = _bn_affine(C)

        bp['ex_w1'] = w_init((C, btl))
        bp['ex_b1'] = b_init(btl)
        bp['ex_w2'] = w_init((btl, C))
        bp['ex_b2'] = b_init(C)
        blocks.append(bp)
    params['blocks'] = blocks

    # MFA conv1x1 weight stored split per block: (n_dil, C, H)
    params['conv1x1'] = dict(w=w_init((n_dil, C, H)), b=b_init(H))

    params['asp'] = dict(w1=w_init((H, btl)), b1=b_init(btl),
                         w2=w_init((btl, H)), b2=b_init(H))

    s1, h1 = _bn_affine(2 * H)
    s2, h2 = _bn_affine(OC)
    s3, h3 = _bn_affine(NC)
    params['head'] = dict(
        s1=s1, h1=h1,
        wp=w_init((2 * H, OC)), bp=b_init(OC),
        s2=s2, h2=h2,
        wf=w_init((OC, NC)), bf=b_init(NC),
        s3=s3, h3=h3)
    return params


def ecapa_forward(params, cfg, x_btc):
    """x_btc: [B, T, in_channels] -> logits [B, num_classes]."""
    p = params['pre']
    x = pre_conv(x_btc, p['w'], p['b'], p['s'], p['h'],
                 pad=cfg['prekernels'] // 2)
    xs = []
    for bp, dil in zip(params['blocks'], cfg['dilations']):
        x = se_res2_block(bp, x, scale=cfg['scale'], kernels=cfg['kernels'],
                          dil=dil)
        xs.append(x)
    return tail(params, cfg, xs)


if __name__ == "__main__":
    B, T = 2, 16
    cfg = dict(in_channels=8, out_channels=16, num_classes=8, channels=16,
               prekernels=5, scale=4, kernels=3, dilations=[2, 3],
               bottleneck=8, hiddens=32)

    params = init_params(cfg, seed=0)

    key = jax.random.PRNGKey(0)
    x_bct = jax.random.normal(key, (B, cfg['in_channels'], T), jnp.float32)
    x_btc = jnp.transpose(x_bct, (0, 2, 1))  # NCT -> NTC (kernel layout)

    logit = ecapa_forward(params, cfg, x_btc)
    logit = jax.block_until_ready(logit)

    assert logit.shape == (B, cfg['num_classes'])
    assert bool(jnp.all(jnp.isfinite(logit)))
    print("KERNEL_OK")
</pallas_src>

<mosaic_0001>
module attributes {stable_mosaic.version = 11 : i64} {
  func.func @_pre_conv_kernel(%arg0: i32, %arg1: memref<1x16x8xf32, #tpu.memory_space<vmem>>, %arg2: memref<5x8x16xf32, #tpu.memory_space<vmem>>, %arg3: memref<1x16xf32, #tpu.memory_space<vmem>>, %arg4: memref<1x16xf32, #tpu.memory_space<vmem>>, %arg5: memref<1x16xf32, #tpu.memory_space<vmem>>, %arg6: memref<1x16x16xf32, #tpu.memory_space<vmem>>) attributes {dimension_semantics = [#tpu.dimension_semantics<parallel>], iteration_bounds = array<i64: 2>, scalar_prefetch = 0 : i64, scratch_operands = 0 : i64, tpu.core_type = #tpu.core_type<tc>, window_params = [{transform_indices = @transform_0, window_bounds = array<i64: 1, 16, 8>}, {pipeline_mode = #tpu.pipeline_mode<synchronous>, transform_indices = @transform_1, window_bounds = array<i64: 5, 8, 16>}, {pipeline_mode = #tpu.pipeline_mode<synchronous>, transform_indices = @transform_2, window_bounds = array<i64: 1, 16>}, {pipeline_mode = #tpu.pipeline_mode<synchronous>, transform_indices = @transform_3, window_bounds = array<i64: 1, 16>}, {pipeline_mode = #tpu.pipeline_mode<synchronous>, transform_indices = @transform_4, window_bounds = array<i64: 1, 16>}, {transform_indices = @transform_5, window_bounds = array<i64: 1, 16, 16>}]} {
    %c0 = arith.constant 0 : index
    %c0_0 = arith.constant 0 : index
    %c0_1 = arith.constant 0 : index
    %0 = vector.load %arg1[%c0, %c0_0, %c0_1] : memref<1x16x8xf32, #tpu.memory_space<vmem>>, vector<1x16x8xf32>
    %1 = vector.shape_cast %0 : vector<1x16x8xf32> to vector<16x8xf32>
    %cst = arith.constant 0.000000e+00 : f32
    %2 = vector.broadcast %cst : f32 to vector<2x8xf32>
    %3 = tpu.concatenate %2, %1, %2 in 0 : vector<2x8xf32>, vector<16x8xf32>, vector<2x8xf32> -> vector<20x8xf32>
    %cst_2 = arith.constant 0.000000e+00 : f32
    %4 = vector.broadcast %cst_2 : f32 to vector<16x16xf32>
    %5 = vector.extract_strided_slice %3 {offsets = [0, 0], sizes = [16, 8], strides = [1, 1]} : vector<20x8xf32> to vector<16x8xf32>
    %c0_3 = arith.constant 0 : index
    %c0_4 = arith.constant 0 : index
    %c0_5 = arith.constant 0 : index
    %6 = vector.load %arg2[%c0_3, %c0_4, %c0_5] : memref<5x8x16xf32, #tpu.memory_space<vmem>>, vector<1x8x16xf32>
    %7 = vector.shape_cast %6 : vector<1x8x16xf32> to vector<8x16xf32>
    %cst_6 = arith.constant dense<0.000000e+00> : vector<16x16xf32>
    %8 = tpu.matmul %5, %7, %cst_6 {dimension_numbers = #tpu.dot_dimension_numbers<[1], [0], [0], [1], [0, 0, 1, 1], [], []>} : vector<16x8xf32>, vector<8x16xf32>, vector<16x16xf32> -> vector<16x16xf32>
    %9 = arith.addf %4, %8 : vector<16x16xf32>
    %10 = vector.extract_strided_slice %3 {offsets = [1, 0], sizes = [16, 8], strides = [1, 1]} : vector<20x8xf32> to vector<16x8xf32>
    %c1 = arith.constant 1 : index
    %c0_7 = arith.constant 0 : index
    %c0_8 = arith.constant 0 : index
    %11 = vector.load %arg2[%c1, %c0_7, %c0_8] : memref<5x8x16xf32, #tpu.memory_space<vmem>>, vector<1x8x16xf32>
    %12 = vector.shape_cast %11 : vector<1x8x16xf32> to vector<8x16xf32>
    %cst_9 = arith.constant dense<0.000000e+00> : vector<16x16xf32>
    %13 = tpu.matmul %10, %12, %cst_9 {dimension_numbers = #tpu.dot_dimension_numbers<[1], [0], [0], [1], [0, 0, 1, 1], [], []>} : vector<16x8xf32>, vector<8x16xf32>, vector<16x16xf32> -> vector<16x16xf32>
    %14 = arith.addf %9, %13 : vector<16x16xf32>
    %15 = vector.extract_strided_slice %3 {offsets = [2, 0], sizes = [16, 8], strides = [1, 1]} : vector<20x8xf32> to vector<16x8xf32>
    %c2 = arith.constant 2 : index
    %c0_10 = arith.constant 0 : index
    %c0_11 = arith.constant 0 : index
    %16 = vector.load %arg2[%c2, %c0_10, %c0_11] : memref<5x8x16xf32, #tpu.memory_space<vmem>>, vector<1x8x16xf32>
    %17 = vector.shape_cast %16 : vector<1x8x16xf32> to vector<8x16xf32>
    %cst_12 = arith.constant dense<0.000000e+00> : vector<16x16xf32>
    %18 = tpu.matmul %15, %17, %cst_12 {dimension_numbers = #tpu.dot_dimension_numbers<[1], [0], [0], [1], [0, 0, 1, 1], [], []>} : vector<16x8xf32>, vector<8x16xf32>, vector<16x16xf32> -> vector<16x16xf32>
    %19 = arith.addf %14, %18 : vector<16x16xf32>
    %20 = vector.extract_strided_slice %3 {offsets = [3, 0], sizes = [16, 8], strides = [1, 1]} : vector<20x8xf32> to vector<16x8xf32>
    %c3 = arith.constant 3 : index
    %c0_13 = arith.constant 0 : index
    %c0_14 = arith.constant 0 : index
    %21 = vector.load %arg2[%c3, %c0_13, %c0_14] : memref<5x8x16xf32, #tpu.memory_space<vmem>>, vector<1x8x16xf32>
    %22 = vector.shape_cast %21 : vector<1x8x16xf32> to vector<8x16xf32>
    %cst_15 = arith.constant dense<0.000000e+00> : vector<16x16xf32>
    %23 = tpu.matmul %20, %22, %cst_15 {dimension_numbers = #tpu.dot_dimension_numbers<[1], [0], [0], [1], [0, 0, 1, 1], [], []>} : vector<16x8xf32>, vector<8x16xf32>, vector<16x16xf32> -> vector<16x16xf32>
    %24 = arith.addf %19, %23 : vector<16x16xf32>
    %25 = vector.extract_strided_slice %3 {offsets = [4, 0], sizes = [16, 8], strides = [1, 1]} : vector<20x8xf32> to vector<16x8xf32>
    %c4 = arith.constant 4 : index
    %c0_16 = arith.constant 0 : index
    %c0_17 = arith.constant 0 : index
    %26 = vector.load %arg2[%c4, %c0_16, %c0_17] : memref<5x8x16xf32, #tpu.memory_space<vmem>>, vector<1x8x16xf32>
    %27 = vector.shape_cast %26 : vector<1x8x16xf32> to vector<8x16xf32>
    %cst_18 = arith.constant dense<0.000000e+00> : vector<16x16xf32>
    %28 = tpu.matmul %25, %27, %cst_18 {dimension_numbers = #tpu.dot_dimension_numbers<[1], [0], [0], [1], [0, 0, 1, 1], [], []>} : vector<16x8xf32>, vector<8x16xf32>, vector<16x16xf32> -> vector<16x16xf32>
    %29 = arith.addf %24, %28 : vector<16x16xf32>
    %c0_19 = arith.constant 0 : index
    %c0_20 = arith.constant 0 : index
    %30 = vector.load %arg3[%c0_19, %c0_20] : memref<1x16xf32, #tpu.memory_space<vmem>>, vector<1x16xf32>
    %31 = vector.broadcast %30 : vector<1x16xf32> to vector<16x16xf32>
    %32 = arith.addf %29, %31 : vector<16x16xf32>
    %cst_21 = arith.constant 0.000000e+00 : f32
    %33 = vector.broadcast %cst_21 : f32 to vector<16x16xf32>
    %34 = arith.maximumf %32, %33 : vector<16x16xf32>
    %c0_22 = arith.constant 0 : index
    %c0_23 = arith.constant 0 : index
    %35 = vector.load %arg4[%c0_22, %c0_23] : memref<1x16xf32, #tpu.memory_space<vmem>>, vector<1x16xf32>
    %36 = vector.broadcast %35 : vector<1x16xf32> to vector<16x16xf32>
    %37 = arith.mulf %34, %36 : vector<16x16xf32>
    %c0_24 = arith.constant 0 : index
    %c0_25 = arith.constant 0 : index
    %38 = vector.load %arg5[%c0_24, %c0_25] : memref<1x16xf32, #tpu.memory_space<vmem>>, vector<1x16xf32>
    %39 = vector.broadcast %38 : vector<1x16xf32> to vector<16x16xf32>
    %40 = arith.addf %37, %39 : vector<16x16xf32>
    %c0_26 = arith.constant 0 : index
    %c0_27 = arith.constant 0 : index
    %c0_28 = arith.constant 0 : index
    %41 = vector.load %arg6[%c0_26, %c0_27, %c0_28] : memref<1x16x16xf32, #tpu.memory_space<vmem>>, vector<1x16x16xf32>
    %42 = vector.shape_cast %41 : vector<1x16x16xf32> to vector<16x16xf32>
    %43 = vector.shape_cast %40 : vector<16x16xf32> to vector<1x16x16xf32>
    tpu.vector_store %arg6[%c0_26, %c0_27, %c0_28], %43 {strides = array<i32>} : memref<1x16x16xf32, #tpu.memory_space<vmem>>, vector<1x16x16xf32>,
    return
  }
  func.func @transform_0(%arg0: i32) -> (i32, i32, i32) {
    %c0_i32 = arith.constant 0 : i32
    %c0_i32_0 = arith.constant 0 : i32
    %c0_i32_1 = arith.constant 0 : i32
    return %arg0, %c0_i32, %c0_i32_0 : i32, i32, i32
  }
  func.func @transform_1(%arg0: i32) -> (i32, i32, i32) {
    %c0_i32 = arith.constant 0 : i32
    %c0_i32_0 = arith.constant 0 : i32
    %c0_i32_1 = arith.constant 0 : i32
    %c0_i32_2 = arith.constant 0 : i32
    return %c0_i32, %c0_i32_0, %c0_i32_1 : i32, i32, i32
  }
  func.func @transform_2(%arg0: i32) -> (i32, i32) {
    %c0_i32 = arith.constant 0 : i32
    %c0_i32_0 = arith.constant 0 : i32
    %c0_i32_1 = arith.constant 0 : i32
    return %c0_i32, %c0_i32_0 : i32, i32
  }
  func.func @transform_3(%arg0: i32) -> (i32, i32) {
    %c0_i32 = arith.constant 0 : i32
    %c0_i32_0 = arith.constant 0 : i32
    %c0_i32_1 = arith.constant 0 : i32
    return %c0_i32, %c0_i32_0 : i32, i32
  }
  func.func @transform_4(%arg0: i32) -> (i32, i32) {
    %c0_i32 = arith.constant 0 : i32
    %c0_i32_0 = arith.constant 0 : i32
    %c0_i32_1 = arith.constant 0 : i32
    return %c0_i32, %c0_i32_0 : i32, i32
  }
  func.func @transform_5(%arg0: i32) -> (i32, i32, i32) {
    %c0_i32 = arith.constant 0 : i32
    %c0_i32_0 = arith.constant 0 : i32
    %c0_i32_1 = arith.constant 0 : i32
    return %arg0, %c0_i32, %c0_i32_0 : i32, i32, i32
  }
}

</mosaic_0001>

<llo_original>
// kernel: tpu_custom_call.1
$region0: #{tpu_custom_call.1}
  #allocation0 [shape = 'u32[]', space=smem, size = 0x4, offset = 0x4, fixed_abs, tag = 'smem constant byte address 0x4 - core index']
  #allocation1 [shape = 'u32[72,128]{1,0:T(1,128)}', space=vmem, size = 0x9000, scoped, tag = 'internal scratch']
  %s0 = inlined_call_operand.vmem [shape: f32[2,16,8], index: 0, kind: input, shape index: {}]
  %s1 = inlined_call_operand.vmem [shape: f32[5,8,16], index: 1, kind: input, shape index: {}]
  %s2 = inlined_call_operand.vmem [shape: f32[1,16], index: 2, kind: input, shape index: {}]
  %s3 = inlined_call_operand.vmem [shape: f32[1,16], index: 3, kind: input, shape index: {}]
  %s4 = inlined_call_operand.vmem [shape: f32[1,16], index: 4, kind: input, shape index: {}]
  %s5 = inlined_call_operand.hbm [shape: f32[2,16,16], index: 5, kind: output, shape index: {}]
  %s6 = sld [smem:[#allocation0]]
  $region53: #{tpu_custom_call.1} parent=0
    _
  %s8 = ssub.s32 1, %s6
  %s9 = scalar_select 0, %s8, %s6
  $region1: #{tpu_custom_call.1} parent=0
    #allocation2 [shape = 'u8[16384]{0}', space=vmem, size = 0x4000, scoped, tag = 'output window, operand 0']
    #allocation3 [shape = 's32[2]{0}', space=sflag, size = 0x8, scoped, tag = 'scoped memory for tpu_custom_call.1']
    %10 = vsyncpa [#allocation3], 0
    %s11 = scalar_lea.sflag [#allocation3], 1
    %12 = vsyncpa %s11, 0
    loop: start=0, step=1, limit=4
    $region2: #{tpu_custom_call.1} parent=1 // loop_pre_header
      _
    $region3: #{tpu_custom_call.1} parent=1 // loop_header
      %s14 = sphi 0, %s18
      %p15 = scmp.ge.s32.totalorder %s14, 4
      %s24 = sphi 0, %s26
      %s27 = sphi 0, %s24
      %s28 = sphi 0, %s27
      %s44 = sphi 0, %s28
      %s48 = sphi 0, %s48
      %s50 = sphi 0, %s48
      %s51 = sphi 0, %s50
      %s65 = sphi 0, %s51
      %s69 = sphi 0, %s69
      %s71 = sphi 0, %s69
      %s72 = sphi 0, %s71
      %s86 = sphi 0, %s72
      %s90 = sphi 0, %s90
      %s92 = sphi 0, %s90
      %s93 = sphi 0, %s92
      %s107 = sphi 0, %s93
      %s111 = sphi 0, %s111
      %s113 = sphi 0, %s111
      %s114 = sphi 0, %s113
      %s128 = sphi 0, %s114
      %s134 = sphi 0, %s136
      %s137 = sphi 0, %s134
      %s138 = sphi 0, %s137
      %s154 = sphi 0, %s138
    $region4: #{tpu_custom_call.1} parent=1 // loop_header_branch
      %17 = sbr.rel (%p15) target = $region8
    $region5: #{tpu_custom_call.1} parent=1 // loop_body
      %s19 = ssub.s32 %s14, 1
      %s20 = ssub.s32 %s14, 2
      %s21 = sadd.s32 %s14, 1
      %s22 = ssub.s32 %s14, %s21
      %p23 = scmp.eq.s32.totalorder %s22, 0
      %s25 = sadd.s32 %s24, 1
      %s26 = scalar_select %p23, %s24, %s25
      %p29 = pneg %p23
      %p30 = scmp.eq.s32.totalorder %s14, 1
      %p31 = por %p29, %p30
      %p32 = scmp.ne.s32.totalorder %s24, %s27
      %p33 = scmp.eq.s32.totalorder %s14, 0
      %p34 = por %p32, %p33
      %p35 = scmp.ne.s32.totalorder %s24, %s27
      %p36 = scmp.eq.s32.totalorder %s19, 1
      %p37 = por %p35, %p36
      %p38 = scmp.ne.s32.totalorder %s27, %s28
      %p39 = scmp.eq.s32.totalorder %s19, 0
      %p40 = por %p38, %p39
      %p41 = scmp.ne.s32.totalorder %s27, %s28
      %p42 = scmp.eq.s32.totalorder %s20, 1
      %p43 = por %p41, %p42
      %p45 = scmp.ne.s32.totalorder %s28, %s44
      %p46 = scmp.eq.s32.totalorder %s20, 0
      %p47 = por %p45, %p46
      %s49 = sadd.s32 %s48, 1
      %p52 = scmp.eq.s32.totalorder %s14, 1
      %p53 = scmp.ne.s32.totalorder %s48, %s50
      %p54 = scmp.eq.s32.totalorder %s14, 0
      %p55 = por %p53, %p54
      %p56 = scmp.ne.s32.totalorder %s48, %s50
      %p57 = scmp.eq.s32.totalorder %s19, 1
      %p58 = por %p56, %p57
      %p59 = scmp.ne.s32.totalorder %s50, %s51
      %p60 = scmp.eq.s32.totalorder %s19, 0
      %p61 = por %p59, %p60
      %p62 = scmp.ne.s32.totalorder %s50, %s51
      %p63 = scmp.eq.s32.totalorder %s20, 1
      %p64 = por %p62, %p63
      %p66 = scmp.ne.s32.totalorder %s51, %s65
      %p67 = scmp.eq.s32.totalorder %s20, 0
      %p68 = por %p66, %p67
      %s70 = sadd.s32 %s69, 1
      %p73 = scmp.eq.s32.totalorder %s14, 1
      %p74 = scmp.ne.s32.totalorder %s69, %s71
      %p75 = scmp.eq.s32.totalorder %s14, 0
      %p76 = por %p74, %p75
      %p77 = scmp.ne.s32.totalorder %s69, %s71
      %p78 = scmp.eq.s32.totalorder %s19, 1
      %p79 = por %p77, %p78
      %p80 = scmp.ne.s32.totalorder %s71, %s72
      %p81 = scmp.eq.s32.totalorder %s19, 0
      %p82 = por %p80, %p81
      %p83 = scmp.ne.s32.totalorder %s71, %s72
      %p84 = scmp.eq.s32.totalorder %s20, 1
      %p85 = por %p83, %p84
      %p87 = scmp.ne.s32.totalorder %s72, %s86
      %p88 = scmp.eq.s32.totalorder %s20, 0
      %p89 = por %p87, %p88
      %s91 = sadd.s32 %s90, 1
      %p94 = scmp.eq.s32.totalorder %s14, 1
      %p95 = scmp.ne.s32.totalorder %s90, %s92
      %p96 = scmp.eq.s32.totalorder %s14, 0
      %p97 = por %p95, %p96
      %p98 = scmp.ne.s32.totalorder %s90, %s92
      %p99 = scmp.eq.s32.totalorder %s19, 1
      %p100 = por %p98, %p99
      %p101 = scmp.ne.s32.totalorder %s92, %s93
      %p102 = scmp.eq.s32.totalorder %s19, 0
      %p103 = por %p101, %p102
      %p104 = scmp.ne.s32.totalorder %s92, %s93
      %p105 = scmp.eq.s32.totalorder %s20, 1
      %p106 = por %p104, %p105
      %p108 = scmp.ne.s32.totalorder %s93, %s107
      %p109 = scmp.eq.s32.totalorder %s20, 0
      %p110 = por %p108, %p109
      %s112 = sadd.s32 %s111, 1
      %p115 = scmp.eq.s32.totalorder %s14, 1
      %p116 = scmp.ne.s32.totalorder %s111, %s113
      %p117 = scmp.eq.s32.totalorder %s14, 0
      %p118 = por %p116, %p117
      %p119 = scmp.ne.s32.totalorder %s111, %s113
      %p120 = scmp.eq.s32.totalorder %s19, 1
      %p121 = por %p119, %p120
      %p122 = scmp.ne.s32.totalorder %s113, %s114
      %p123 = scmp.eq.s32.totalorder %s19, 0
      %p124 = por %p122, %p123
      %p125 = scmp.ne.s32.totalorder %s113, %s114
      %p126 = scmp.eq.s32.totalorder %s20, 1
      %p127 = por %p125, %p126
      %p129 = scmp.ne.s32.totalorder %s114, %s128
      %p130 = scmp.eq.s32.totalorder %s20, 0
      %p131 = por %p129, %p130
      %s132 = ssub.s32 %s14, %s21
      %p133 = scmp.eq.s32.totalorder %s132, 0
      %s135 = sadd.s32 %s134, 1
      %s136 = scalar_select %p133, %s134, %s135
      %p139 = pneg %p133
      %p140 = scmp.eq.s32.totalorder %s14, 1
      %p141 = por %p139, %p140
      %p142 = scmp.ne.s32.totalorder %s134, %s137
      %p143 = scmp.eq.s32.totalorder %s14, 0
      %p144 = por %p142, %p143
      %p145 = scmp.ne.s32.totalorder %s134, %s137
      %p146 = scmp.eq.s32.totalorder %s19, 1
      %p147 = por %p145, %p146
      %p148 = scmp.ne.s32.totalorder %s137, %s138
      %p149 = scmp.eq.s32.totalorder %s19, 0
      %p150 = por %p148, %p149
      %p151 = scmp.ne.s32.totalorder %s137, %s138
      %p152 = scmp.eq.s32.totalorder %s20, 1
      %p153 = por %p151, %p152
      %p155 = scmp.ne.s32.totalorder %s138, %s154
      %p156 = scmp.eq.s32.totalorder %s20, 0
      %p157 = por %p155, %p156
      %p158 = scmp.le.s32.totalorder 1, %s14
      %p159 = scmp.lt.s32.totalorder %s14, 3
      %p160 = pnand %p158, %p159
      %p161 = pneg %p160
      // Predicated region
      $region9: #{tpu_custom_call.1} parent=5 // pred_check
        _
      $region10: #{tpu_custom_call.1} parent=5 // pred_check_branch
        %163 = sbr.rel (%p160) target = $region12
      $region11: #{tpu_custom_call.1} parent=5 // pred_region
        %s164 = ssub.s32 %s14, 1
        // Predicated region
        $region13: #{tpu_custom_call.1} parent=11 // pred_check
          %p165 = pneg %p61
        $region14: #{tpu_custom_call.1} parent=11 // pred_check_branch
          %167 = sbr.rel (%p165) target = $region16
        $region15: #{tpu_custom_call.1} parent=11 // pred_region
          _
        $region16: #{tpu_custom_call.1} parent=11 // pred_fallthru
          _
        // Predicated region
        $region17: #{tpu_custom_call.1} parent=11 // pred_check
          %p168 = pneg %p82
        $region18: #{tpu_custom_call.1} parent=11 // pred_check_branch
          %170 = sbr.rel (%p168) target = $region20
        $region19: #{tpu_custom_call.1} parent=11 // pred_region
          _
        $region20: #{tpu_custom_call.1} parent=11 // pred_fallthru
          _
        // Predicated region
        $region21: #{tpu_custom_call.1} parent=11 // pred_check
          %p171 = pneg %p103
        $region22: #{tpu_custom_call.1} parent=11 // pred_check_branch
          %173 = sbr.rel (%p171) target = $region24
        $region23: #{tpu_custom_call.1} parent=11 // pred_region
          _
        $region24: #{tpu_custom_call.1} parent=11 // pred_fallthru
          _
        // Predicated region
        $region25: #{tpu_custom_call.1} parent=11 // pred_check
          %p174 = pneg %p124
        $region26: #{tpu_custom_call.1} parent=11 // pred_check_branch
          %176 = sbr.rel (%p174) target = $region28
        $region27: #{tpu_custom_call.1} parent=11 // pred_region
          _
        $region28: #{tpu_custom_call.1} parent=11 // pred_fallthru
          _
      $region12: #{tpu_custom_call.1} parent=5 // pred_fallthru
        _
      %p177 = scmp.lt.s32.totalorder %s14, 2
      // Predicated region
      $region29: #{tpu_custom_call.1} parent=5 // pred_check
        %p178 = pneg %p177
      $region30: #{tpu_custom_call.1} parent=5 // pred_check_branch
        %180 = sbr.rel (%p178) target = $region32
      $region31: #{tpu_custom_call.1} parent=5 // pred_region
        // Predicated region
        $region33: #{tpu_custom_call.1} parent=31 // pred_check
          %p181 = pneg %p34
        $region34: #{tpu_custom_call.1} parent=31 // pred_check_branch
          %183 = sbr.rel (%p181) target = $region36
        $region35: #{tpu_custom_call.1} parent=31 // pred_region
          %p184 = scmp.lt.s32.totalorder %s14, 1
          %s185 = scalar_select %p184, %s14, 1
          %s186 = smul.addr %s185, 2
          %s187 = smul.addr %s186, 8
          %s188 = scalar_lea.vmem %s0, %s187
        $region36: #{tpu_custom_call.1} parent=31 // pred_fallthru
          _
      $region32: #{tpu_custom_call.1} parent=5 // pred_fallthru
        _
      %p189 = scmp.le.s32.totalorder 1, %s14
      %p190 = scmp.lt.s32.totalorder %s14, 3
      %p191 = pnand %p189, %p190
      %p192 = pneg %p191
      // Predicated region
      $region37: #{tpu_custom_call.1} parent=5 // pred_check
        _
      $region38: #{tpu_custom_call.1} parent=5 // pred_check_branch
        %194 = sbr.rel (%p191) target = $region40
      $region39: #{tpu_custom_call.1} parent=5 // pred_region
        %s195 = ssub.s32 %s14, 1
        %p196 = scmp.lt.s32.totalorder %s19, 1
        %s197 = scalar_select %p196, %s19, 1
        %s198 = smul.addr %s197, 2
        %s199 = smul.addr %s198, 8
        %s200 = scalar_lea.vmem %s0, %s199
        %p201 = pneg %p40
        %p202 = pneg %p37
        %p203 = pneg %p61
        %p204 = pneg %p58
        %p205 = pneg %p82
        %p206 = pneg %p79
        %p207 = pneg %p103
        %p208 = pneg %p100
        %p209 = pneg %p124
        %p210 = pneg %p121
        %p211 = pneg %p150
        %p212 = pneg %p147
        %s213 = sand.u32 %s137, 1
        %s214 = scalar_lea.sflag [#allocation3], %s213
        %s215 = sand.u32 %s137, 1
        %s216 = smul.addr %s215, 16
        %s217 = scalar_lea.vmem [#allocation2], %s216
        %p218 = scmp.lt.s32.totalorder %s19, 1
        %s219 = scalar_select %p218, %s19, 1
        %s220 = smul.addr %s219, 2
        %s221 = smul.addr %s220, 8
        %s222 = scalar_lea.vmem %s0, %s221
        %v223 = vld [vmem:[%s222] sm:$0xff]
        %v224 = vld [vmem:[%s222 + $0x8] sm:$0xff]
        %vm227 = vcmask 1041408
        %v228 = vrot.slane %v223, 6
        %v229 = vrot.slane %v224, 6
        %v230 = vsel %vm227, %v228, %v229
        %v233 = vsel %vm227, 0.0, %v228
        %v234 = vsel %vm227, %v229, 0.0
        %v235 = vld [vmem:[%s1] sm:$0xff]
        %s236 = scalar_lea.vmem %s1, 8
        %v237 = vld [vmem:[%s236] sm:$0xff]
        %vm240 = vcmask 1046528
        %v241 = vrot.slane %v233, 1
        %v242 = vrot.slane %v230, 1
        %v243 = vsel %vm240, %v241, %v242
        %v244 = vrot.slane %v234, 1
        %v245 = vsel %vm240, %v242, %v244
        %vm246 = vcmask 64512
        %v247 = vsel %vm246, %v243, 0
        %v249 = vsel %vm246, %v245, 0
        %251 = vmatpush.msra.mxu0 0.0
        %252 = vmatpush.msra.mxu0 0.0
        %253 = vmatpush.msra.mxu0 0.0
        %254 = vmatpush.msra.mxu0 0.0
        %255 = vmatpush.msra.mxu0 0.0
        %256 = vmatpush.msra.mxu0 0.0
        %257 = vmatpush.msra.mxu0 0.0
        %258 = vmatpush.msra.mxu0 0.0
        %259 = vmatpush.msra.mxu0 0.0
        %260 = vmatpush.msra.mxu0 0.0
        %261 = vmatpush.msra.mxu0 0.0
        %262 = vmatpush.msra.mxu0 0.0
        %263 = vmatpush.msra.mxu0 0.0
        %264 = vmatpush.msra.mxu0 0.0
        %265 = vmatpush.msra.mxu0 0.0
        %266 = vmatpush.msra.mxu0 %v237
        %267 = vmatmul.f32.gmra.mxu0 %v247
        %v268 = vpop.f32.mrf.mxu0
        %v269 = vadd.f32 0.0, %v268
        %270 = vmatmul.f32.gmra.mxu0 %v249
        %v271 = vpop.f32.mrf.mxu0
        %v272 = vadd.f32 0.0, %v271
        %273 = vdwg.mxu0
        %v274 = vsel %vm246, %v233, 0
        %v276 = vsel %vm246, %v230, 0
        %278 = vmatpush.msra.mxu0 0.0
        %279 = vmatpush.msra.mxu0 0.0
        %280 = vmatpush.msra.mxu0 0.0
        %281 = vmatpush.msra.mxu0 0.0
        %282 = vmatpush.msra.mxu0 0.0
        %283 = vmatpush.msra.mxu0 0.0
        %284 = vmatpush.msra.mxu0 0.0
        %285 = vmatpush.msra.mxu0 0.0
        %286 = vmatpush.msra.mxu0 0.0
        %287 = vmatpush.msra.mxu0 0.0
        %288 = vmatpush.msra.mxu0 0.0
        %289 = vmatpush.msra.mxu0 0.0
        %290 = vmatpush.msra.mxu0 0.0
        %291 = vmatpush.msra.mxu0 0.0
        %292 = vmatpush.msra.mxu0 0.0
        %293 = vmatpush.msra.mxu0 %v235
        %294 = vmatmul.f32.gmra.mxu0 %v274
        %v295 = vpop.f32.mrf.mxu0
        %v296 = vadd.f32 %v269, %v295
        %297 = vmatmul.f32.gmra.mxu0 %v276
        %v298 = vpop.f32.mrf.mxu0
        %v299 = vadd.f32 %v272, %v298
        %300 = vdwg.mxu0
        %s301 = scalar_lea.vmem %s1, 16
        %v302 = vld [vmem:[%s301] sm:$0xff]
        %vm303 = vcmask 1045504
        %v304 = vrot.slane %v233, 2
        %v305 = vrot.slane %v230, 2
        %v306 = vsel %vm303, %v304, %v305
        %v307 = vrot.slane %v234, 2
        %v308 = vsel %vm303, %v305, %v307
        %v309 = vsel %vm246, %v306, 0
        %v311 = vsel %vm246, %v308, 0
        %313 = vmatpush.msra.mxu0 0.0
        %314 = vmatpush.msra.mxu0 0.0
        %315 = vmatpush.msra.mxu0 0.0
        %316 = vmatpush.msra.mxu0 0.0
        %317 = vmatpush.msra.mxu0 0.0
        %318 = vmatpush.msra.mxu0 0.0
        %319 = vmatpush.msra.mxu0 0.0
        %320 = vmatpush.msra.mxu0 0.0
        %321 = vmatpush.msra.mxu0 0.0
        %322 = vmatpush.msra.mxu0 0.0
        %323 = vmatpush.msra.mxu0 0.0
        %324 = vmatpush.msra.mxu0 0.0
        %325 = vmatpush.msra.mxu0 0.0
        %326 = vmatpush.msra.mxu0 0.0
        %327 = vmatpush.msra.mxu0 0.0
        %328 = vmatpush.msra.mxu0 %v302
        %329 = vmatmul.f32.gmra.mxu0 %v309
        %v330 = vpop.f32.mrf.mxu0
        %v331 = vadd.f32 0.0, %v330
        %332 = vmatmul.f32.gmra.mxu0 %v311
        %v333 = vpop.f32.mrf.mxu0
        %v334 = vadd.f32 0.0, %v333
        %335 = vdwg.mxu0
        %v336 = vadd.f32 %v296, %v331
        %v337 = vadd.f32 %v299, %v334
        %s338 = scalar_lea.vmem %s1, 24
        %v339 = vld [vmem:[%s338] sm:$0xff]
        %vm340 = vcmask 1044480
        %v341 = vrot.slane %v233, 3
        %v342 = vrot.slane %v230, 3
        %v343 = vsel %vm340, %v341, %v342
        %v344 = vrot.slane %v234, 3
        %v345 = vsel %vm340, %v342, %v344
        %v346 = vsel %vm246, %v343, 0
        %v348 = vsel %vm246, %v345, 0
        %350 = vmatpush.msra.mxu0 0.0
        %351 = vmatpush.msra.mxu0 0.0
        %352 = vmatpush.msra.mxu0 0.0
        %353 = vmatpush.msra.mxu0 0.0
        %354 = vmatpush.msra.mxu0 0.0
        %355 = vmatpush.msra.mxu0 0.0
        %356 = vmatpush.msra.mxu0 0.0
        %357 = vmatpush.msra.mxu0 0.0
        %358 = vmatpush.msra.mxu0 0.0
        %359 = vmatpush.msra.mxu0 0.0
        %360 = vmatpush.msra.mxu0 0.0
        %361 = vmatpush.msra.mxu0 0.0
        %362 = vmatpush.msra.mxu0 0.0
        %363 = vmatpush.msra.mxu0 0.0
        %364 = vmatpush.msra.mxu0 0.0
        %365 = vmatpush.msra.mxu0 %v339
        %366 = vmatmul.f32.gmra.mxu0 %v346
        %v367 = vpop.f32.mrf.mxu0
        %v368 = vadd.f32 0.0, %v367
        %369 = vmatmul.f32.gmra.mxu0 %v348
        %v370 = vpop.f32.mrf.mxu0
        %v371 = vadd.f32 0.0, %v370
        %372 = vdwg.mxu0
        %v373 = vadd.f32 %v336, %v368
        %v374 = vadd.f32 %v337, %v371
        %s375 = scalar_lea.vmem %s1, 32
        %v376 = vld [vmem:[%s375] sm:$0xff]
        %vm377 = vcmask 1043456
        %v378 = vrot.slane %v233, 4
        %v379 = vrot.slane %v230, 4
        %v380 = vsel %vm377, %v378, %v379
        %v381 = vrot.slane %v234, 4
        %v382 = vsel %vm377, %v379, %v381
        %v383 = vsel %vm246, %v380, 0
        %v385 = vsel %vm246, %v382, 0
        %387 = vmatpush.msra.mxu0 0.0
        %388 = vmatpush.msra.mxu0 0.0
        %389 = vmatpush.msra.mxu0 0.0
        %390 = vmatpush.msra.mxu0 0.0
        %391 = vmatpush.msra.mxu0 0.0
        %392 = vmatpush.msra.mxu0 0.0
        %393 = vmatpush.msra.mxu0 0.0
        %394 = vmatpush.msra.mxu0 0.0
        %395 = vmatpush.msra.mxu0 0.0
        %396 = vmatpush.msra.mxu0 0.0
        %397 = vmatpush.msra.mxu0 0.0
        %398 = vmatpush.msra.mxu0 0.0
        %399 = vmatpush.msra.mxu0 0.0
        %400 = vmatpush.msra.mxu0 0.0
        %401 = vmatpush.msra.mxu0 0.0
        %402 = vmatpush.msra.mxu0 %v376
        %403 = vmatmul.f32.gmra.mxu0 %v383
        %v404 = vpop.f32.mrf.mxu0
        %v405 = vadd.f32 0.0, %v404
        %406 = vmatmul.f32.gmra.mxu0 %v385
        %v407 = vpop.f32.mrf.mxu0
        %v408 = vadd.f32 0.0, %v407
        %409 = vdwg.mxu0
        %v410 = vadd.f32 %v373, %v405
        %v411 = vadd.f32 %v374, %v408
        %v412 = vld [vmem:[%s2] sm:$0x1]
        %v414 = vperm.slane %v412, 0
        %v416 = vadd.f32 %v410, %v414
        %v417 = vadd.f32 %v411, %v414
        %v418 = vmax.f32 %v416, 0.0
        %v419 = vmax.f32 %v417, 0.0
        %v420 = vld [vmem:[%s3] sm:$0x1]
        %v422 = vperm.slane %v420, 0
        %v424 = vmul.f32 %v418, %v422
        %v425 = vmul.f32 %v419, %v422
        %v426 = vld [vmem:[%s4] sm:$0x1]
        %v428 = vperm.slane %v426, 0
        %v430 = vadd.f32 %v424, %v428
        %v431 = vadd.f32 %v425, %v428
        %vm432 = vcmask 130048
        %433 = vst.msk [vmem:[%s217] sm:$0xff] %vm432, %v430
        %434 = vst.msk [vmem:[%s217 + $0x8] sm:$0xff] %vm432, %v431
        %s435 = sand.u32 %s137, 1
        %s436 = scalar_lea.sflag [#allocation3], %s435
        %s437 = sand.u32 %s137, 1
        %s438 = smul.addr %s437, 16
        %s439 = scalar_lea.vmem [#allocation2], %s438
        // Predicated region
        $region41: #{tpu_custom_call.1} parent=39 // pred_check
          %p440 = pneg %p147
        $region42: #{tpu_custom_call.1} parent=39 // pred_check_branch
          %442 = sbr.rel (%p440) target = $region44
        $region43: #{tpu_custom_call.1} parent=39 // pred_region
          %444 = vsyncadd %s436, 0
          %s445 = smul.addr %s19, 2
          %s446 = smul.addr %s445, 8
          %s447 = scalar_lea.hbm %s5, %s446
          %s448 = sshll.u32 %s439, 4
          %s449 = int_to_ptr.vmem [resolvable:$true] %s448
          %s450 = sshll.u32 %s447, 4
          %s451 = int_to_ptr.hbm [resolvable:$true] %s450
          %456 = dma.vmem_to_hbm [thread:$0]  %s449, 256, %s451, %s436, 128, 128, 8
        $region44: #{tpu_custom_call.1} parent=39 // pred_fallthru
          _
      $region40: #{tpu_custom_call.1} parent=5 // pred_fallthru
        _
      %p457 = scmp.le.s32.totalorder 2, %s14
      // Predicated region
      $region45: #{tpu_custom_call.1} parent=5 // pred_check
        %p458 = pneg %p457
      $region46: #{tpu_custom_call.1} parent=5 // pred_check_branch
        %460 = sbr.rel (%p458) target = $region48
      $region47: #{tpu_custom_call.1} parent=5 // pred_region
        %s461 = ssub.s32 %s14, 2
        // Predicated region
        $region49: #{tpu_custom_call.1} parent=47 // pred_check
          %p462 = pneg %p153
        $region50: #{tpu_custom_call.1} parent=47 // pred_check_branch
          %464 = sbr.rel (%p462) target = $region52
        $region51: #{tpu_custom_call.1} parent=47 // pred_region
          %s465 = sand.u32 %s138, 1
          %s466 = scalar_lea.sflag [#allocation3], %s465
          %s467 = sand.u32 %s138, 1
          %s468 = smul.addr %s467, 16
          %s469 = scalar_lea.vmem [#allocation2], %s468
          %471 = dma.done %s466, 256
        $region52: #{tpu_custom_call.1} parent=47 // pred_fallthru
          _
      $region48: #{tpu_custom_call.1} parent=5 // pred_fallthru
        _
    $region6: #{tpu_custom_call.1} parent=1 // loop_footer
      %s18 = sadd.s32 1, %s14
    $region7: #{tpu_custom_call.1} parent=1 // loop_footer_branch
      %13 = sbr.rel target = $region3
    $region8: #{tpu_custom_call.1} parent=1 // loop_exit
      _
    %472 = vsyncpa [#allocation3], 1
    %s473 = scalar_lea.sflag [#allocation3], 1
    %474 = vsyncpa %s473, 1

</llo_original>
